<compile_context>
chip_gen: v7x
topology: tpu7x:2x2x1
jax: 0.10.0
libtpu: 0.0.40
codegen_flags: <defaults>
</compile_context>

<pallas_src>
import functools

import jax
import jax.numpy as jnp
import numpy as np
from jax import lax
from jax.experimental import pallas as pl
from jax.experimental.pallas import tpu as pltpu


def _round_up(x, m):
    return -(-x // m) * m


def _yolo_loss_kernel(preds_ref, targets_ref, out_ref, *, S, B, C,
                      lambda_coord, lambda_noobj):
    # preds_ref / targets_ref: (D, R_blk, 128) feature-major blocks.
    R_blk = preds_ref.shape[1]
    inv_S = jnp.float32(1.0 / S)

    def pch(c):
        return preds_ref[c].astype(jnp.float32)      # (R_blk, 128)

    def tch(c):
        return targets_ref[c].astype(jnp.float32)

    def box(loader, b):
        x = loader(5 * b + 0)
        y = loader(5 * b + 1)
        w = loader(5 * b + 2)
        h = loader(5 * b + 3)
        conf = loader(5 * b + 4)
        cx = x * inv_S
        cy = y * inv_S
        x1 = cx - 0.5 * w
        y1 = cy - 0.5 * h
        x2 = cx + 0.5 * w
        y2 = cy + 0.5 * h
        area = (x2 - x1) * (y2 - y1)                 # hoisted, same formula as ref
        return dict(x=x, y=y, w=w, h=h, conf=conf,
                    x1=x1, y1=y1, x2=x2, y2=y2, area=area)

    pred_boxes = [box(pch, b) for b in range(B)]
    targ_boxes = [box(tch, b) for b in range(B)]

    conf_t = targ_boxes[0]["conf"]                   # target confidence (box 0)
    coord_mask = conf_t == 1.0                       # object cells
    noobj_mask = conf_t == 0.0                       # background + zero padding

    def iou(tb, pb):
        lx = jnp.maximum(tb["x1"], pb["x1"])
        ly = jnp.maximum(tb["y1"], pb["y1"])
        ux = jnp.minimum(tb["x2"], pb["x2"])
        uy = jnp.minimum(tb["y2"], pb["y2"])
        inter = jnp.maximum(ux - lx, 0.0) * jnp.maximum(uy - ly, 0.0)
        # TODO(synk): pl.reciprocal(..., approx=True) would move this divide to
        # the EUP, but its ~2^-12 error is borderline vs the 2e-4 check.
        return inter / (tb["area"] + pb["area"] - inter + 1e-6)

    zero = jnp.zeros((R_blk, 128), jnp.float32)
    coords_v, dims_v, obj_v, noobj_v, labels_v = zero, zero, zero, zero, zero

    for j in range(B):                               # loop over target boxes
        tb = targ_boxes[j]
        # argmax over predicted boxes of IoU(target_j, pred_k); strict '>' so
        # the first max wins on ties (torch.max semantics).
        best_iou = iou(tb, pred_boxes[0])
        bx, by = pred_boxes[0]["x"], pred_boxes[0]["y"]
        bw, bh = pred_boxes[0]["w"], pred_boxes[0]["h"]
        bc = pred_boxes[0]["conf"]
        for k in range(1, B):
            cur = iou(tb, pred_boxes[k])
            better = cur > best_iou
            pb = pred_boxes[k]
            bx = jnp.where(better, pb["x"], bx)
            by = jnp.where(better, pb["y"], by)
            bw = jnp.where(better, pb["w"], bw)
            bh = jnp.where(better, pb["h"], bh)
            bc = jnp.where(better, pb["conf"], bc)
            best_iou = jnp.where(better, cur, best_iou)

        coords_v = coords_v + (bx - tb["x"]) ** 2 + (by - tb["y"]) ** 2
        dims_v = dims_v + ((jnp.sqrt(bw) - jnp.sqrt(tb["w"])) ** 2 +
                           (jnp.sqrt(bh) - jnp.sqrt(tb["h"])) ** 2)
        obj_v = obj_v + (bc - best_iou) ** 2

    for b in range(B):                               # no-object confidence loss
        cp = pred_boxes[b]["conf"]
        noobj_v = noobj_v + cp * cp

    for c in range(5 * B, 5 * B + C):                # class-probability loss
        d = pch(c) - tch(c)
        labels_v = labels_v + d * d

    # Gate each accumulator exactly once (select, so masked-out NaN/Inf never
    # reach the sums), then one cross-lane reduce per loss.
    loss_coords = lambda_coord * jnp.sum(jnp.where(coord_mask, coords_v, 0.0))
    loss_dims = lambda_coord * jnp.sum(jnp.where(coord_mask, dims_v, 0.0))
    loss_obj = jnp.sum(jnp.where(coord_mask, obj_v, 0.0))
    loss_noobj = lambda_noobj * jnp.sum(jnp.where(noobj_mask, noobj_v, 0.0))
    loss_labels = jnp.sum(jnp.where(coord_mask, labels_v, 0.0))

    # Pack the five per-tile partials into (sublane 0, lanes 0..4) of this
    # tile's private (1, 8, 128) output block; the wrapper sums all blocks.
    lane = lax.broadcasted_iota(jnp.int32, (8, 128), 1)
    sub = lax.broadcasted_iota(jnp.int32, (8, 128), 0)
    row0 = sub == 0
    out = jnp.where(jnp.logical_and(row0, lane == 0), loss_coords, 0.0)
    out = jnp.where(jnp.logical_and(row0, lane == 1), loss_dims, out)
    out = jnp.where(jnp.logical_and(row0, lane == 2), loss_obj, out)
    out = jnp.where(jnp.logical_and(row0, lane == 3), loss_noobj, out)
    out = jnp.where(jnp.logical_and(row0, lane == 4), loss_labels, out)
    out_ref[...] = out.reshape(1, 8, 128).astype(jnp.float32)


def yolo_loss(preds, targets, *, S=7, B=2, C=20,
              lambda_coord=5.0, lambda_noobj=0.5):
    """preds / targets: (N, S, S, 5*B + C), channels-last (f32 or bf16)."""
    D = 5 * B + C
    assert preds.shape[-1] == D and targets.shape[-1] == D
    N = preds.shape[0]
    M = N * S * S

    # ---- relayout to feature-major, sublane+lane-dense (D, R, 128) ---------
    # TODO(synk): produce this layout upstream to drop the transpose pass too.
    R0 = -(-M // 128)
    # R_blk <= 8 -> each channel slice is one f32 vreg; R0 > 8 -> >=2 grid
    # steps so the "parallel" axis can shard across v7x's two TensorCores.
    R_blk = R0 if R0 <= 8 else 8
    R = _round_up(R0, R_blk)
    Mp = R * 128
    num_tiles = R // R_blk

    pm = preds.reshape(M, D)
    tm = targets.reshape(M, D)
    if Mp != M:
        # Zero padding is semantically inert: padded cells have target conf 0
        # (-> noobj mask) and pred conf 0 (-> 0 loss contribution), so the
        # kernel needs no lane-validity mask.
        pm = jnp.pad(pm, ((0, Mp - M), (0, 0)))
        tm = jnp.pad(tm, ((0, Mp - M), (0, 0)))
    p3 = jnp.transpose(pm).reshape(D, R, 128)
    t3 = jnp.transpose(tm).reshape(D, R, 128)

    kernel = functools.partial(
        _yolo_loss_kernel, S=S, B=B, C=C,
        lambda_coord=float(lambda_coord), lambda_noobj=float(lambda_noobj))

    partials = pl.pallas_call(
        kernel,
        out_shape=jax.ShapeDtypeStruct((num_tiles, 8, 128), jnp.float32),
        grid=(num_tiles,),
        in_specs=[
            pl.BlockSpec((D, R_blk, 128), lambda i: (0, i, 0)),
            pl.BlockSpec((D, R_blk, 128), lambda i: (0, i, 0)),
        ],
        out_specs=pl.BlockSpec((1, 8, 128), lambda i: (i, 0, 0)),
        compiler_params=pltpu.CompilerParams(
            dimension_semantics=("parallel",)),
    )(p3, t3)

    totals = jnp.sum(partials, axis=(0, 1))     # tiny (128,) XLA reduction
    return (totals[0], totals[1], totals[2], totals[3], totals[4])


def yolo_loss_ref(preds, targets, S=7, B=2, C=20, lc=5.0, ln=0.5):
    """Pure NumPy transcription of the PyTorch forward (for verification)."""
    preds = np.asarray(preds, np.float32)
    targets = np.asarray(targets, np.float32)
    coord_mask = targets[..., 4] == 1
    noobj_mask = targets[..., 4] == 0
    cp = preds[coord_mask][..., :5 * B].reshape(-1, B, 5)
    ct = targets[coord_mask][..., :5 * B].reshape(-1, B, 5)

    def corners(b):
        xy = b[..., :2] / S
        wh = b[..., 2:4]
        return np.concatenate([xy - 0.5 * wh, xy + 0.5 * wh], -1)

    pxy = corners(cp)
    txy = corners(ct)
    b1 = np.broadcast_to(txy[:, None, :, :], (txy.shape[0], B, B, 4))
    b2 = np.broadcast_to(pxy[:, :, None, :], (pxy.shape[0], B, B, 4))
    lower = np.maximum(b1[..., :2], b2[..., :2])
    upper = np.minimum(b1[..., 2:], b2[..., 2:])
    inter = np.clip(upper - lower, 0, None).prod(-1)
    a1 = (b1[..., 2] - b1[..., 0]) * (b1[..., 3] - b1[..., 1])
    a2 = (b2[..., 2] - b2[..., 0]) * (b2[..., 3] - b2[..., 1])
    iou = inter / (a1 + a2 - inter + 1e-6)
    max_idx = iou.argmax(-2)
    max_iou = iou.max(-2)
    resp = np.take_along_axis(cp, max_idx[..., None], axis=1)
    loss_coords = ((resp[..., :2] - ct[..., :2]) ** 2).sum()
    loss_dims = ((np.sqrt(resp[..., 2:4]) - np.sqrt(ct[..., 2:4])) ** 2).sum()
    loss_obj = ((resp[..., 4] - max_iou) ** 2).sum()
    noobj_preds = preds[noobj_mask]
    loss_noobj = (noobj_preds[..., 4:B * 5:5] ** 2).sum()
    lp = preds[coord_mask][..., 5 * B:]
    lt = targets[coord_mask][..., 5 * B:]
    loss_labels = ((lp - lt) ** 2).sum()
    return (lc * loss_coords, lc * loss_dims, loss_obj, ln * loss_noobj,
            loss_labels)


if __name__ == "__main__":
    N, S, B, C = 2, 7, 2, 20
    D = 5 * B + C

    key = jax.random.PRNGKey(0)
    k1, k2, k3 = jax.random.split(key, 3)
    # positive values so sqrt(w), sqrt(h) is well defined (as in real YOLO data)
    preds = jax.random.uniform(k1, (N, S, S, D), jnp.float32, 0.05, 0.95)
    targets = jax.random.uniform(k2, (N, S, S, D), jnp.float32, 0.05, 0.95)
    obj = (jax.random.uniform(k3, (N, S, S)) < 0.3).astype(jnp.float32)
    targets = targets.at[..., 4].set(obj)   # exactly 0.0 / 1.0 indicator

    losses = yolo_loss(preds, targets, S=S, B=B, C=C,
                       lambda_coord=5.0, lambda_noobj=0.5)
    losses = jax.block_until_ready(losses)

    ref = yolo_loss_ref(preds, targets, S=S, B=B, C=C, lc=5.0, ln=0.5)
    np.testing.assert_allclose(np.array([float(x) for x in losses]),
                               np.array(ref, np.float32),
                               rtol=2e-4, atol=2e-4)
    print("KERNEL_OK")
</pallas_src>

<mosaic_0001>
module attributes {stable_mosaic.version = 11 : i64} {
  func.func @_yolo_loss_kernel(%arg0: i32, %arg1: memref<30x1x128xf32, #tpu.memory_space<vmem>>, %arg2: memref<30x1x128xf32, #tpu.memory_space<vmem>>, %arg3: memref<1x8x128xf32, #tpu.memory_space<vmem>>) attributes {dimension_semantics = [#tpu.dimension_semantics<parallel>], iteration_bounds = array<i64: 1>, scalar_prefetch = 0 : i64, scratch_operands = 0 : i64, tpu.core_type = #tpu.core_type<tc>, window_params = [{transform_indices = @transform_0, window_bounds = array<i64: 30, 1, 128>}, {transform_indices = @transform_1, window_bounds = array<i64: 30, 1, 128>}, {transform_indices = @transform_2, window_bounds = array<i64: 1, 8, 128>}]} {
    %c0 = arith.constant 0 : index
    %c0_0 = arith.constant 0 : index
    %c0_1 = arith.constant 0 : index
    %0 = vector.load %arg1[%c0, %c0_0, %c0_1] : memref<30x1x128xf32, #tpu.memory_space<vmem>>, vector<1x1x128xf32>
    %1 = vector.shape_cast %0 : vector<1x1x128xf32> to vector<1x128xf32>
    %c1 = arith.constant 1 : index
    %c0_2 = arith.constant 0 : index
    %c0_3 = arith.constant 0 : index
    %2 = vector.load %arg1[%c1, %c0_2, %c0_3] : memref<30x1x128xf32, #tpu.memory_space<vmem>>, vector<1x1x128xf32>
    %3 = vector.shape_cast %2 : vector<1x1x128xf32> to vector<1x128xf32>
    %c2 = arith.constant 2 : index
    %c0_4 = arith.constant 0 : index
    %c0_5 = arith.constant 0 : index
    %4 = vector.load %arg1[%c2, %c0_4, %c0_5] : memref<30x1x128xf32, #tpu.memory_space<vmem>>, vector<1x1x128xf32>
    %5 = vector.shape_cast %4 : vector<1x1x128xf32> to vector<1x128xf32>
    %c3 = arith.constant 3 : index
    %c0_6 = arith.constant 0 : index
    %c0_7 = arith.constant 0 : index
    %6 = vector.load %arg1[%c3, %c0_6, %c0_7] : memref<30x1x128xf32, #tpu.memory_space<vmem>>, vector<1x1x128xf32>
    %7 = vector.shape_cast %6 : vector<1x1x128xf32> to vector<1x128xf32>
    %c4 = arith.constant 4 : index
    %c0_8 = arith.constant 0 : index
    %c0_9 = arith.constant 0 : index
    %8 = vector.load %arg1[%c4, %c0_8, %c0_9] : memref<30x1x128xf32, #tpu.memory_space<vmem>>, vector<1x1x128xf32>
    %9 = vector.shape_cast %8 : vector<1x1x128xf32> to vector<1x128xf32>
    %cst = arith.constant 0.142857149 : f32
    %10 = vector.broadcast %cst : f32 to vector<1x128xf32>
    %11 = arith.mulf %1, %10 : vector<1x128xf32>
    %cst_10 = arith.constant 0.142857149 : f32
    %12 = vector.broadcast %cst_10 : f32 to vector<1x128xf32>
    %13 = arith.mulf %3, %12 : vector<1x128xf32>
    %cst_11 = arith.constant 5.000000e-01 : f32
    %14 = vector.broadcast %cst_11 : f32 to vector<1x128xf32>
    %15 = arith.mulf %14, %5 : vector<1x128xf32>
    %16 = arith.subf %11, %15 : vector<1x128xf32>
    %cst_12 = arith.constant 5.000000e-01 : f32
    %17 = vector.broadcast %cst_12 : f32 to vector<1x128xf32>
    %18 = arith.mulf %17, %7 : vector<1x128xf32>
    %19 = arith.subf %13, %18 : vector<1x128xf32>
    %cst_13 = arith.constant 5.000000e-01 : f32
    %20 = vector.broadcast %cst_13 : f32 to vector<1x128xf32>
    %21 = arith.mulf %20, %5 : vector<1x128xf32>
    %22 = arith.addf %11, %21 : vector<1x128xf32>
    %cst_14 = arith.constant 5.000000e-01 : f32
    %23 = vector.broadcast %cst_14 : f32 to vector<1x128xf32>
    %24 = arith.mulf %23, %7 : vector<1x128xf32>
    %25 = arith.addf %13, %24 : vector<1x128xf32>
    %26 = arith.subf %22, %16 : vector<1x128xf32>
    %27 = arith.subf %25, %19 : vector<1x128xf32>
    %28 = arith.mulf %26, %27 : vector<1x128xf32>
    %c5 = arith.constant 5 : index
    %c0_15 = arith.constant 0 : index
    %c0_16 = arith.constant 0 : index
    %29 = vector.load %arg1[%c5, %c0_15, %c0_16] : memref<30x1x128xf32, #tpu.memory_space<vmem>>, vector<1x1x128xf32>
    %30 = vector.shape_cast %29 : vector<1x1x128xf32> to vector<1x128xf32>
    %c6 = arith.constant 6 : index
    %c0_17 = arith.constant 0 : index
    %c0_18 = arith.constant 0 : index
    %31 = vector.load %arg1[%c6, %c0_17, %c0_18] : memref<30x1x128xf32, #tpu.memory_space<vmem>>, vector<1x1x128xf32>
    %32 = vector.shape_cast %31 : vector<1x1x128xf32> to vector<1x128xf32>
    %c7 = arith.constant 7 : index
    %c0_19 = arith.constant 0 : index
    %c0_20 = arith.constant 0 : index
    %33 = vector.load %arg1[%c7, %c0_19, %c0_20] : memref<30x1x128xf32, #tpu.memory_space<vmem>>, vector<1x1x128xf32>
    %34 = vector.shape_cast %33 : vector<1x1x128xf32> to vector<1x128xf32>
    %c8 = arith.constant 8 : index
    %c0_21 = arith.constant 0 : index
    %c0_22 = arith.constant 0 : index
    %35 = vector.load %arg1[%c8, %c0_21, %c0_22] : memref<30x1x128xf32, #tpu.memory_space<vmem>>, vector<1x1x128xf32>
    %36 = vector.shape_cast %35 : vector<1x1x128xf32> to vector<1x128xf32>
    %c9 = arith.constant 9 : index
    %c0_23 = arith.constant 0 : index
    %c0_24 = arith.constant 0 : index
    %37 = vector.load %arg1[%c9, %c0_23, %c0_24] : memref<30x1x128xf32, #tpu.memory_space<vmem>>, vector<1x1x128xf32>
    %38 = vector.shape_cast %37 : vector<1x1x128xf32> to vector<1x128xf32>
    %cst_25 = arith.constant 0.142857149 : f32
    %39 = vector.broadcast %cst_25 : f32 to vector<1x128xf32>
    %40 = arith.mulf %30, %39 : vector<1x128xf32>
    %cst_26 = arith.constant 0.142857149 : f32
    %41 = vector.broadcast %cst_26 : f32 to vector<1x128xf32>
    %42 = arith.mulf %32, %41 : vector<1x128xf32>
    %cst_27 = arith.constant 5.000000e-01 : f32
    %43 = vector.broadcast %cst_27 : f32 to vector<1x128xf32>
    %44 = arith.mulf %43, %34 : vector<1x128xf32>
    %45 = arith.subf %40, %44 : vector<1x128xf32>
    %cst_28 = arith.constant 5.000000e-01 : f32
    %46 = vector.broadcast %cst_28 : f32 to vector<1x128xf32>
    %47 = arith.mulf %46, %36 : vector<1x128xf32>
    %48 = arith.subf %42, %47 : vector<1x128xf32>
    %cst_29 = arith.constant 5.000000e-01 : f32
    %49 = vector.broadcast %cst_29 : f32 to vector<1x128xf32>
    %50 = arith.mulf %49, %34 : vector<1x128xf32>
    %51 = arith.addf %40, %50 : vector<1x128xf32>
    %cst_30 = arith.constant 5.000000e-01 : f32
    %52 = vector.broadcast %cst_30 : f32 to vector<1x128xf32>
    %53 = arith.mulf %52, %36 : vector<1x128xf32>
    %54 = arith.addf %42, %53 : vector<1x128xf32>
    %55 = arith.subf %51, %45 : vector<1x128xf32>
    %56 = arith.subf %54, %48 : vector<1x128xf32>
    %57 = arith.mulf %55, %56 : vector<1x128xf32>
    %c0_31 = arith.constant 0 : index
    %c0_32 = arith.constant 0 : index
    %c0_33 = arith.constant 0 : index
    %58 = vector.load %arg2[%c0_31, %c0_32, %c0_33] : memref<30x1x128xf32, #tpu.memory_space<vmem>>, vector<1x1x128xf32>
    %59 = vector.shape_cast %58 : vector<1x1x128xf32> to vector<1x128xf32>
    %c1_34 = arith.constant 1 : index
    %c0_35 = arith.constant 0 : index
    %c0_36 = arith.constant 0 : index
    %60 = vector.load %arg2[%c1_34, %c0_35, %c0_36] : memref<30x1x128xf32, #tpu.memory_space<vmem>>, vector<1x1x128xf32>
    %61 = vector.shape_cast %60 : vector<1x1x128xf32> to vector<1x128xf32>
    %c2_37 = arith.constant 2 : index
    %c0_38 = arith.constant 0 : index
    %c0_39 = arith.constant 0 : index
    %62 = vector.load %arg2[%c2_37, %c0_38, %c0_39] : memref<30x1x128xf32, #tpu.memory_space<vmem>>, vector<1x1x128xf32>
    %63 = vector.shape_cast %62 : vector<1x1x128xf32> to vector<1x128xf32>
    %c3_40 = arith.constant 3 : index
    %c0_41 = arith.constant 0 : index
    %c0_42 = arith.constant 0 : index
    %64 = vector.load %arg2[%c3_40, %c0_41, %c0_42] : memref<30x1x128xf32, #tpu.memory_space<vmem>>, vector<1x1x128xf32>
    %65 = vector.shape_cast %64 : vector<1x1x128xf32> to vector<1x128xf32>
    %c4_43 = arith.constant 4 : index
    %c0_44 = arith.constant 0 : index
    %c0_45 = arith.constant 0 : index
    %66 = vector.load %arg2[%c4_43, %c0_44, %c0_45] : memref<30x1x128xf32, #tpu.memory_space<vmem>>, vector<1x1x128xf32>
    %67 = vector.shape_cast %66 : vector<1x1x128xf32> to vector<1x128xf32>
    %cst_46 = arith.constant 0.142857149 : f32
    %68 = vector.broadcast %cst_46 : f32 to vector<1x128xf32>
    %69 = arith.mulf %59, %68 : vector<1x128xf32>
    %cst_47 = arith.constant 0.142857149 : f32
    %70 = vector.broadcast %cst_47 : f32 to vector<1x128xf32>
    %71 = arith.mulf %61, %70 : vector<1x128xf32>
    %cst_48 = arith.constant 5.000000e-01 : f32
    %72 = vector.broadcast %cst_48 : f32 to vector<1x128xf32>
    %73 = arith.mulf %72, %63 : vector<1x128xf32>
    %74 = arith.subf %69, %73 : vector<1x128xf32>
    %cst_49 = arith.constant 5.000000e-01 : f32
    %75 = vector.broadcast %cst_49 : f32 to vector<1x128xf32>
    %76 = arith.mulf %75, %65 : vector<1x128xf32>
    %77 = arith.subf %71, %76 : vector<1x128xf32>
    %cst_50 = arith.constant 5.000000e-01 : f32
    %78 = vector.broadcast %cst_50 : f32 to vector<1x128xf32>
    %79 = arith.mulf %78, %63 : vector<1x128xf32>
    %80 = arith.addf %69, %79 : vector<1x128xf32>
    %cst_51 = arith.constant 5.000000e-01 : f32
    %81 = vector.broadcast %cst_51 : f32 to vector<1x128xf32>
    %82 = arith.mulf %81, %65 : vector<1x128xf32>
    %83 = arith.addf %71, %82 : vector<1x128xf32>
    %84 = arith.subf %80, %74 : vector<1x128xf32>
    %85 = arith.subf %83, %77 : vector<1x128xf32>
    %86 = arith.mulf %84, %85 : vector<1x128xf32>
    %c5_52 = arith.constant 5 : index
    %c0_53 = arith.constant 0 : index
    %c0_54 = arith.constant 0 : index
    %87 = vector.load %arg2[%c5_52, %c0_53, %c0_54] : memref<30x1x128xf32, #tpu.memory_space<vmem>>, vector<1x1x128xf32>
    %88 = vector.shape_cast %87 : vector<1x1x128xf32> to vector<1x128xf32>
    %c6_55 = arith.constant 6 : index
    %c0_56 = arith.constant 0 : index
    %c0_57 = arith.constant 0 : index
    %89 = vector.load %arg2[%c6_55, %c0_56, %c0_57] : memref<30x1x128xf32, #tpu.memory_space<vmem>>, vector<1x1x128xf32>
    %90 = vector.shape_cast %89 : vector<1x1x128xf32> to vector<1x128xf32>
    %c7_58 = arith.constant 7 : index
    %c0_59 = arith.constant 0 : index
    %c0_60 = arith.constant 0 : index
    %91 = vector.load %arg2[%c7_58, %c0_59, %c0_60] : memref<30x1x128xf32, #tpu.memory_space<vmem>>, vector<1x1x128xf32>
    %92 = vector.shape_cast %91 : vector<1x1x128xf32> to vector<1x128xf32>
    %c8_61 = arith.constant 8 : index
    %c0_62 = arith.constant 0 : index
    %c0_63 = arith.constant 0 : index
    %93 = vector.load %arg2[%c8_61, %c0_62, %c0_63] : memref<30x1x128xf32, #tpu.memory_space<vmem>>, vector<1x1x128xf32>
    %94 = vector.shape_cast %93 : vector<1x1x128xf32> to vector<1x128xf32>
    %cst_64 = arith.constant 0.142857149 : f32
    %95 = vector.broadcast %cst_64 : f32 to vector<1x128xf32>
    %96 = arith.mulf %88, %95 : vector<1x128xf32>
    %cst_65 = arith.constant 0.142857149 : f32
    %97 = vector.broadcast %cst_65 : f32 to vector<1x128xf32>
    %98 = arith.mulf %90, %97 : vector<1x128xf32>
    %cst_66 = arith.constant 5.000000e-01 : f32
    %99 = vector.broadcast %cst_66 : f32 to vector<1x128xf32>
    %100 = arith.mulf %99, %92 : vector<1x128xf32>
    %101 = arith.subf %96, %100 : vector<1x128xf32>
    %cst_67 = arith.constant 5.000000e-01 : f32
    %102 = vector.broadcast %cst_67 : f32 to vector<1x128xf32>
    %103 = arith.mulf %102, %94 : vector<1x128xf32>
    %104 = arith.subf %98, %103 : vector<1x128xf32>
    %cst_68 = arith.constant 5.000000e-01 : f32
    %105 = vector.broadcast %cst_68 : f32 to vector<1x128xf32>
    %106 = arith.mulf %105, %92 : vector<1x128xf32>
    %107 = arith.addf %96, %106 : vector<1x128xf32>
    %cst_69 = arith.constant 5.000000e-01 : f32
    %108 = vector.broadcast %cst_69 : f32 to vector<1x128xf32>
    %109 = arith.mulf %108, %94 : vector<1x128xf32>
    %110 = arith.addf %98, %109 : vector<1x128xf32>
    %111 = arith.subf %107, %101 : vector<1x128xf32>
    %112 = arith.subf %110, %104 : vector<1x128xf32>
    %113 = arith.mulf %111, %112 : vector<1x128xf32>
    %cst_70 = arith.constant 1.000000e+00 : f32
    %114 = vector.broadcast %cst_70 : f32 to vector<1x128xf32>
    %115 = arith.cmpf oeq, %67, %114 : vector<1x128xf32>
    %cst_71 = arith.constant 0.000000e+00 : f32
    %116 = vector.broadcast %cst_71 : f32 to vector<1x128xf32>
    %117 = arith.cmpf oeq, %67, %116 : vector<1x128xf32>
    %cst_72 = arith.constant 0.000000e+00 : f32
    %118 = vector.broadcast %cst_72 : f32 to vector<1x128xf32>
    %119 = arith.maximumf %74, %16 : vector<1x128xf32>
    %120 = arith.maximumf %77, %19 : vector<1x128xf32>
    %121 = arith.minimumf %80, %22 : vector<1x128xf32>
    %122 = arith.minimumf %83, %25 : vector<1x128xf32>
    %123 = arith.subf %121, %119 : vector<1x128xf32>
    %cst_73 = arith.constant 0.000000e+00 : f32
    %124 = vector.broadcast %cst_73 : f32 to vector<1x128xf32>
    %125 = arith.maximumf %123, %124 : vector<1x128xf32>
    %126 = arith.subf %122, %120 : vector<1x128xf32>
    %cst_74 = arith.constant 0.000000e+00 : f32
    %127 = vector.broadcast %cst_74 : f32 to vector<1x128xf32>
    %128 = arith.maximumf %126, %127 : vector<1x128xf32>
    %129 = arith.mulf %125, %128 : vector<1x128xf32>
    %130 = arith.addf %86, %28 : vector<1x128xf32>
    %131 = arith.subf %130, %129 : vector<1x128xf32>
    %cst_75 = arith.constant 9.99999997E-7 : f32
    %132 = vector.broadcast %cst_75 : f32 to vector<1x128xf32>
    %133 = arith.addf %131, %132 : vector<1x128xf32>
    %134 = arith.divf %129, %133 : vector<1x128xf32>
    %135 = arith.maximumf %74, %45 : vector<1x128xf32>
    %136 = arith.maximumf %77, %48 : vector<1x128xf32>
    %137 = arith.minimumf %80, %51 : vector<1x128xf32>
    %138 = arith.minimumf %83, %54 : vector<1x128xf32>
    %139 = arith.subf %137, %135 : vector<1x128xf32>
    %cst_76 = arith.constant 0.000000e+00 : f32
    %140 = vector.broadcast %cst_76 : f32 to vector<1x128xf32>
    %141 = arith.maximumf %139, %140 : vector<1x128xf32>
    %142 = arith.subf %138, %136 : vector<1x128xf32>
    %cst_77 = arith.constant 0.000000e+00 : f32
    %143 = vector.broadcast %cst_77 : f32 to vector<1x128xf32>
    %144 = arith.maximumf %142, %143 : vector<1x128xf32>
    %145 = arith.mulf %141, %144 : vector<1x128xf32>
    %146 = arith.addf %86, %57 : vector<1x128xf32>
    %147 = arith.subf %146, %145 : vector<1x128xf32>
    %cst_78 = arith.constant 9.99999997E-7 : f32
    %148 = vector.broadcast %cst_78 : f32 to vector<1x128xf32>
    %149 = arith.addf %147, %148 : vector<1x128xf32>
    %150 = arith.divf %145, %149 : vector<1x128xf32>
    %151 = arith.cmpf ogt, %150, %134 : vector<1x128xf32>
    %152 = arith.select %151, %30, %1 : vector<1x128xi1>, vector<1x128xf32>
    %153 = arith.select %151, %32, %3 : vector<1x128xi1>, vector<1x128xf32>
    %154 = arith.select %151, %34, %5 : vector<1x128xi1>, vector<1x128xf32>
    %155 = arith.select %151, %36, %7 : vector<1x128xi1>, vector<1x128xf32>
    %156 = arith.select %151, %38, %9 : vector<1x128xi1>, vector<1x128xf32>
    %157 = arith.select %151, %150, %134 : vector<1x128xi1>, vector<1x128xf32>
    %158 = arith.subf %152, %59 : vector<1x128xf32>
    %159 = arith.mulf %158, %158 : vector<1x128xf32>
    %160 = arith.addf %118, %159 : vector<1x128xf32>
    %161 = arith.subf %153, %61 : vector<1x128xf32>
    %162 = arith.mulf %161, %161 : vector<1x128xf32>
    %163 = arith.addf %160, %162 : vector<1x128xf32>
    %164 = math.sqrt %154 : vector<1x128xf32>
    %165 = math.sqrt %63 : vector<1x128xf32>
    %166 = arith.subf %164, %165 : vector<1x128xf32>
    %167 = arith.mulf %166, %166 : vector<1x128xf32>
    %168 = math.sqrt %155 : vector<1x128xf32>
    %169 = math.sqrt %65 : vector<1x128xf32>
    %170 = arith.subf %168, %169 : vector<1x128xf32>
    %171 = arith.mulf %170, %170 : vector<1x128xf32>
    %172 = arith.addf %167, %171 : vector<1x128xf32>
    %173 = arith.addf %118, %172 : vector<1x128xf32>
    %174 = arith.subf %156, %157 : vector<1x128xf32>
    %175 = arith.mulf %174, %174 : vector<1x128xf32>
    %176 = arith.addf %118, %175 : vector<1x128xf32>
    %177 = arith.maximumf %101, %16 : vector<1x128xf32>
    %178 = arith.maximumf %104, %19 : vector<1x128xf32>
    %179 = arith.minimumf %107, %22 : vector<1x128xf32>
    %180 = arith.minimumf %110, %25 : vector<1x128xf32>
    %181 = arith.subf %179, %177 : vector<1x128xf32>
    %cst_79 = arith.constant 0.000000e+00 : f32
    %182 = vector.broadcast %cst_79 : f32 to vector<1x128xf32>
    %183 = arith.maximumf %181, %182 : vector<1x128xf32>
    %184 = arith.subf %180, %178 : vector<1x128xf32>
    %cst_80 = arith.constant 0.000000e+00 : f32
    %185 = vector.broadcast %cst_80 : f32 to vector<1x128xf32>
    %186 = arith.maximumf %184, %185 : vector<1x128xf32>
    %187 = arith.mulf %183, %186 : vector<1x128xf32>
    %188 = arith.addf %113, %28 : vector<1x128xf32>
    %189 = arith.subf %188, %187 : vector<1x128xf32>
    %cst_81 = arith.constant 9.99999997E-7 : f32
    %190 = vector.broadcast %cst_81 : f32 to vector<1x128xf32>
    %191 = arith.addf %189, %190 : vector<1x128xf32>
    %192 = arith.divf %187, %191 : vector<1x128xf32>
    %193 = arith.maximumf %101, %45 : vector<1x128xf32>
    %194 = arith.maximumf %104, %48 : vector<1x128xf32>
    %195 = arith.minimumf %107, %51 : vector<1x128xf32>
    %196 = arith.minimumf %110, %54 : vector<1x128xf32>
    %197 = arith.subf %195, %193 : vector<1x128xf32>
    %cst_82 = arith.constant 0.000000e+00 : f32
    %198 = vector.broadcast %cst_82 : f32 to vector<1x128xf32>
    %199 = arith.maximumf %197, %198 : vector<1x128xf32>
    %200 = arith.subf %196, %194 : vector<1x128xf32>
    %cst_83 = arith.constant 0.000000e+00 : f32
    %201 = vector.broadcast %cst_83 : f32 to vector<1x128xf32>
    %202 = arith.maximumf %200, %201 : vector<1x128xf32>
    %203 = arith.mulf %199, %202 : vector<1x128xf32>
    %204 = arith.addf %113, %57 : vector<1x128xf32>
    %205 = arith.subf %204, %203 : vector<1x128xf32>
    %cst_84 = arith.constant 9.99999997E-7 : f32
    %206 = vector.broadcast %cst_84 : f32 to vector<1x128xf32>
    %207 = arith.addf %205, %206 : vector<1x128xf32>
    %208 = arith.divf %203, %207 : vector<1x128xf32>
    %209 = arith.cmpf ogt, %208, %192 : vector<1x128xf32>
    %210 = arith.select %209, %30, %1 : vector<1x128xi1>, vector<1x128xf32>
    %211 = arith.select %209, %32, %3 : vector<1x128xi1>, vector<1x128xf32>
    %212 = arith.select %209, %34, %5 : vector<1x128xi1>, vector<1x128xf32>
    %213 = arith.select %209, %36, %7 : vector<1x128xi1>, vector<1x128xf32>
    %214 = arith.select %209, %38, %9 : vector<1x128xi1>, vector<1x128xf32>
    %215 = arith.select %209, %208, %192 : vector<1x128xi1>, vector<1x128xf32>
    %216 = arith.subf %210, %88 : vector<1x128xf32>
    %217 = arith.mulf %216, %216 : vector<1x128xf32>
    %218 = arith.addf %163, %217 : vector<1x128xf32>
    %219 = arith.subf %211, %90 : vector<1x128xf32>
    %220 = arith.mulf %219, %219 : vector<1x128xf32>
    %221 = arith.addf %218, %220 : vector<1x128xf32>
    %222 = math.sqrt %212 : vector<1x128xf32>
    %223 = math.sqrt %92 : vector<1x128xf32>
    %224 = arith.subf %222, %223 : vector<1x128xf32>
    %225 = arith.mulf %224, %224 : vector<1x128xf32>
    %226 = math.sqrt %213 : vector<1x128xf32>
    %227 = math.sqrt %94 : vector<1x128xf32>
    %228 = arith.subf %226, %227 : vector<1x128xf32>
    %229 = arith.mulf %228, %228 : vector<1x128xf32>
    %230 = arith.addf %225, %229 : vector<1x128xf32>
    %231 = arith.addf %173, %230 : vector<1x128xf32>
    %232 = arith.subf %214, %215 : vector<1x128xf32>
    %233 = arith.mulf %232, %232 : vector<1x128xf32>
    %234 = arith.addf %176, %233 : vector<1x128xf32>
    %235 = arith.mulf %9, %9 : vector<1x128xf32>
    %236 = arith.addf %118, %235 : vector<1x128xf32>
    %237 = arith.mulf %38, %38 : vector<1x128xf32>
    %238 = arith.addf %236, %237 : vector<1x128xf32>
    %c10 = arith.constant 10 : index
    %c0_85 = arith.constant 0 : index
    %c0_86 = arith.constant 0 : index
    %239 = vector.load %arg1[%c10, %c0_85, %c0_86] : memref<30x1x128xf32, #tpu.memory_space<vmem>>, vector<1x1x128xf32>
    %240 = vector.shape_cast %239 : vector<1x1x128xf32> to vector<1x128xf32>
    %c10_87 = arith.constant 10 : index
    %c0_88 = arith.constant 0 : index
    %c0_89 = arith.constant 0 : index
    %241 = vector.load %arg2[%c10_87, %c0_88, %c0_89] : memref<30x1x128xf32, #tpu.memory_space<vmem>>, vector<1x1x128xf32>
    %242 = vector.shape_cast %241 : vector<1x1x128xf32> to vector<1x128xf32>
    %243 = arith.subf %240, %242 : vector<1x128xf32>
    %244 = arith.mulf %243, %243 : vector<1x128xf32>
    %245 = arith.addf %118, %244 : vector<1x128xf32>
    %c11 = arith.constant 11 : index
    %c0_90 = arith.constant 0 : index
    %c0_91 = arith.constant 0 : index
    %246 = vector.load %arg1[%c11, %c0_90, %c0_91] : memref<30x1x128xf32, #tpu.memory_space<vmem>>, vector<1x1x128xf32>
    %247 = vector.shape_cast %246 : vector<1x1x128xf32> to vector<1x128xf32>
    %c11_92 = arith.constant 11 : index
    %c0_93 = arith.constant 0 : index
    %c0_94 = arith.constant 0 : index
    %248 = vector.load %arg2[%c11_92, %c0_93, %c0_94] : memref<30x1x128xf32, #tpu.memory_space<vmem>>, vector<1x1x128xf32>
    %249 = vector.shape_cast %248 : vector<1x1x128xf32> to vector<1x128xf32>
    %250 = arith.subf %247, %249 : vector<1x128xf32>
    %251 = arith.mulf %250, %250 : vector<1x128xf32>
    %252 = arith.addf %245, %251 : vector<1x128xf32>
    %c12 = arith.constant 12 : index
    %c0_95 = arith.constant 0 : index
    %c0_96 = arith.constant 0 : index
    %253 = vector.load %arg1[%c12, %c0_95, %c0_96] : memref<30x1x128xf32, #tpu.memory_space<vmem>>, vector<1x1x128xf32>
    %254 = vector.shape_cast %253 : vector<1x1x128xf32> to vector<1x128xf32>
    %c12_97 = arith.constant 12 : index
    %c0_98 = arith.constant 0 : index
    %c0_99 = arith.constant 0 : index
    %255 = vector.load %arg2[%c12_97, %c0_98, %c0_99] : memref<30x1x128xf32, #tpu.memory_space<vmem>>, vector<1x1x128xf32>
    %256 = vector.shape_cast %255 : vector<1x1x128xf32> to vector<1x128xf32>
    %257 = arith.subf %254, %256 : vector<1x128xf32>
    %258 = arith.mulf %257, %257 : vector<1x128xf32>
    %259 = arith.addf %252, %258 : vector<1x128xf32>
    %c13 = arith.constant 13 : index
    %c0_100 = arith.constant 0 : index
    %c0_101 = arith.constant 0 : index
    %260 = vector.load %arg1[%c13, %c0_100, %c0_101] : memref<30x1x128xf32, #tpu.memory_space<vmem>>, vector<1x1x128xf32>
    %261 = vector.shape_cast %260 : vector<1x1x128xf32> to vector<1x128xf32>
    %c13_102 = arith.constant 13 : index
    %c0_103 = arith.constant 0 : index
    %c0_104 = arith.constant 0 : index
    %262 = vector.load %arg2[%c13_102, %c0_103, %c0_104] : memref<30x1x128xf32, #tpu.memory_space<vmem>>, vector<1x1x128xf32>
    %263 = vector.shape_cast %262 : vector<1x1x128xf32> to vector<1x128xf32>
    %264 = arith.subf %261, %263 : vector<1x128xf32>
    %265 = arith.mulf %264, %264 : vector<1x128xf32>
    %266 = arith.addf %259, %265 : vector<1x128xf32>
    %c14 = arith.constant 14 : index
    %c0_105 = arith.constant 0 : index
    %c0_106 = arith.constant 0 : index
    %267 = vector.load %arg1[%c14, %c0_105, %c0_106] : memref<30x1x128xf32, #tpu.memory_space<vmem>>, vector<1x1x128xf32>
    %268 = vector.shape_cast %267 : vector<1x1x128xf32> to vector<1x128xf32>
    %c14_107 = arith.constant 14 : index
    %c0_108 = arith.constant 0 : index
    %c0_109 = arith.constant 0 : index
    %269 = vector.load %arg2[%c14_107, %c0_108, %c0_109] : memref<30x1x128xf32, #tpu.memory_space<vmem>>, vector<1x1x128xf32>
    %270 = vector.shape_cast %269 : vector<1x1x128xf32> to vector<1x128xf32>
    %271 = arith.subf %268, %270 : vector<1x128xf32>
    %272 = arith.mulf %271, %271 : vector<1x128xf32>
    %273 = arith.addf %266, %272 : vector<1x128xf32>
    %c15 = arith.constant 15 : index
    %c0_110 = arith.constant 0 : index
    %c0_111 = arith.constant 0 : index
    %274 = vector.load %arg1[%c15, %c0_110, %c0_111] : memref<30x1x128xf32, #tpu.memory_space<vmem>>, vector<1x1x128xf32>
    %275 = vector.shape_cast %274 : vector<1x1x128xf32> to vector<1x128xf32>
    %c15_112 = arith.constant 15 : index
    %c0_113 = arith.constant 0 : index
    %c0_114 = arith.constant 0 : index
    %276 = vector.load %arg2[%c15_112, %c0_113, %c0_114] : memref<30x1x128xf32, #tpu.memory_space<vmem>>, vector<1x1x128xf32>
    %277 = vector.shape_cast %276 : vector<1x1x128xf32> to vector<1x128xf32>
    %278 = arith.subf %275, %277 : vector<1x128xf32>
    %279 = arith.mulf %278, %278 : vector<1x128xf32>
    %280 = arith.addf %273, %279 : vector<1x128xf32>
    %c16 = arith.constant 16 : index
    %c0_115 = arith.constant 0 : index
    %c0_116 = arith.constant 0 : index
    %281 = vector.load %arg1[%c16, %c0_115, %c0_116] : memref<30x1x128xf32, #tpu.memory_space<vmem>>, vector<1x1x128xf32>
    %282 = vector.shape_cast %281 : vector<1x1x128xf32> to vector<1x128xf32>
    %c16_117 = arith.constant 16 : index
    %c0_118 = arith.constant 0 : index
    %c0_119 = arith.constant 0 : index
    %283 = vector.load %arg2[%c16_117, %c0_118, %c0_119] : memref<30x1x128xf32, #tpu.memory_space<vmem>>, vector<1x1x128xf32>
    %284 = vector.shape_cast %283 : vector<1x1x128xf32> to vector<1x128xf32>
    %285 = arith.subf %282, %284 : vector<1x128xf32>
    %286 = arith.mulf %285, %285 : vector<1x128xf32>
    %287 = arith.addf %280, %286 : vector<1x128xf32>
    %c17 = arith.constant 17 : index
    %c0_120 = arith.constant 0 : index
    %c0_121 = arith.constant 0 : index
    %288 = vector.load %arg1[%c17, %c0_120, %c0_121] : memref<30x1x128xf32, #tpu.memory_space<vmem>>, vector<1x1x128xf32>
    %289 = vector.shape_cast %288 : vector<1x1x128xf32> to vector<1x128xf32>
    %c17_122 = arith.constant 17 : index
    %c0_123 = arith.constant 0 : index
    %c0_124 = arith.constant 0 : index
    %290 = vector.load %arg2[%c17_122, %c0_123, %c0_124] : memref<30x1x128xf32, #tpu.memory_space<vmem>>, vector<1x1x128xf32>
    %291 = vector.shape_cast %290 : vector<1x1x128xf32> to vector<1x128xf32>
    %292 = arith.subf %289, %291 : vector<1x128xf32>
    %293 = arith.mulf %292, %292 : vector<1x128xf32>
    %294 = arith.addf %287, %293 : vector<1x128xf32>
    %c18 = arith.constant 18 : index
    %c0_125 = arith.constant 0 : index
    %c0_126 = arith.constant 0 : index
    %295 = vector.load %arg1[%c18, %c0_125, %c0_126] : memref<30x1x128xf32, #tpu.memory_space<vmem>>, vector<1x1x128xf32>
    %296 = vector.shape_cast %295 : vector<1x1x128xf32> to vector<1x128xf32>
    %c18_127 = arith.constant 18 : index
    %c0_128 = arith.constant 0 : index
    %c0_129 = arith.constant 0 : index
    %297 = vector.load %arg2[%c18_127, %c0_128, %c0_129] : memref<30x1x128xf32, #tpu.memory_space<vmem>>, vector<1x1x128xf32>
    %298 = vector.shape_cast %297 : vector<1x1x128xf32> to vector<1x128xf32>
    %299 = arith.subf %296, %298 : vector<1x128xf32>
    %300 = arith.mulf %299, %299 : vector<1x128xf32>
    %301 = arith.addf %294, %300 : vector<1x128xf32>
    %c19 = arith.constant 19 : index
    %c0_130 = arith.constant 0 : index
    %c0_131 = arith.constant 0 : index
    %302 = vector.load %arg1[%c19, %c0_130, %c0_131] : memref<30x1x128xf32, #tpu.memory_space<vmem>>, vector<1x1x128xf32>
    %303 = vector.shape_cast %302 : vector<1x1x128xf32> to vector<1x128xf32>
    %c19_132 = arith.constant 19 : index
    %c0_133 = arith.constant 0 : index
    %c0_134 = arith.constant 0 : index
    %304 = vector.load %arg2[%c19_132, %c0_133, %c0_134] : memref<30x1x128xf32, #tpu.memory_space<vmem>>, vector<1x1x128xf32>
    %305 = vector.shape_cast %304 : vector<1x1x128xf32> to vector<1x128xf32>
    %306 = arith.subf %303, %305 : vector<1x128xf32>
    %307 = arith.mulf %306, %306 : vector<1x128xf32>
    %308 = arith.addf %301, %307 : vector<1x128xf32>
    %c20 = arith.constant 20 : index
    %c0_135 = arith.constant 0 : index
    %c0_136 = arith.constant 0 : index
    %309 = vector.load %arg1[%c20, %c0_135, %c0_136] : memref<30x1x128xf32, #tpu.memory_space<vmem>>, vector<1x1x128xf32>
    %310 = vector.shape_cast %309 : vector<1x1x128xf32> to vector<1x128xf32>
    %c20_137 = arith.constant 20 : index
    %c0_138 = arith.constant 0 : index
    %c0_139 = arith.constant 0 : index
    %311 = vector.load %arg2[%c20_137, %c0_138, %c0_139] : memref<30x1x128xf32, #tpu.memory_space<vmem>>, vector<1x1x128xf32>
    %312 = vector.shape_cast %311 : vector<1x1x128xf32> to vector<1x128xf32>
    %313 = arith.subf %310, %312 : vector<1x128xf32>
    %314 = arith.mulf %313, %313 : vector<1x128xf32>
    %315 = arith.addf %308, %314 : vector<1x128xf32>
    %c21 = arith.constant 21 : index
    %c0_140 = arith.constant 0 : index
    %c0_141 = arith.constant 0 : index
    %316 = vector.load %arg1[%c21, %c0_140, %c0_141] : memref<30x1x128xf32, #tpu.memory_space<vmem>>, vector<1x1x128xf32>
    %317 = vector.shape_cast %316 : vector<1x1x128xf32> to vector<1x128xf32>
    %c21_142 = arith.constant 21 : index
    %c0_143 = arith.constant 0 : index
    %c0_144 = arith.constant 0 : index
    %318 = vector.load %arg2[%c21_142, %c0_143, %c0_144] : memref<30x1x128xf32, #tpu.memory_space<vmem>>, vector<1x1x128xf32>
    %319 = vector.shape_cast %318 : vector<1x1x128xf32> to vector<1x128xf32>
    %320 = arith.subf %317, %319 : vector<1x128xf32>
    %321 = arith.mulf %320, %320 : vector<1x128xf32>
    %322 = arith.addf %315, %321 : vector<1x128xf32>
    %c22 = arith.constant 22 : index
    %c0_145 = arith.constant 0 : index
    %c0_146 = arith.constant 0 : index
    %323 = vector.load %arg1[%c22, %c0_145, %c0_146] : memref<30x1x128xf32, #tpu.memory_space<vmem>>, vector<1x1x128xf32>
    %324 = vector.shape_cast %323 : vector<1x1x128xf32> to vector<1x128xf32>
    %c22_147 = arith.constant 22 : index
    %c0_148 = arith.constant 0 : index
    %c0_149 = arith.constant 0 : index
    %325 = vector.load %arg2[%c22_147, %c0_148, %c0_149] : memref<30x1x128xf32, #tpu.memory_space<vmem>>, vector<1x1x128xf32>
    %326 = vector.shape_cast %325 : vector<1x1x128xf32> to vector<1x128xf32>
    %327 = arith.subf %324, %326 : vector<1x128xf32>
    %328 = arith.mulf %327, %327 : vector<1x128xf32>
    %329 = arith.addf %322, %328 : vector<1x128xf32>
    %c23 = arith.constant 23 : index
    %c0_150 = arith.constant 0 : index
    %c0_151 = arith.constant 0 : index
    %330 = vector.load %arg1[%c23, %c0_150, %c0_151] : memref<30x1x128xf32, #tpu.memory_space<vmem>>, vector<1x1x128xf32>
    %331 = vector.shape_cast %330 : vector<1x1x128xf32> to vector<1x128xf32>
    %c23_152 = arith.constant 23 : index
    %c0_153 = arith.constant 0 : index
    %c0_154 = arith.constant 0 : index
    %332 = vector.load %arg2[%c23_152, %c0_153, %c0_154] : memref<30x1x128xf32, #tpu.memory_space<vmem>>, vector<1x1x128xf32>
    %333 = vector.shape_cast %332 : vector<1x1x128xf32> to vector<1x128xf32>
    %334 = arith.subf %331, %333 : vector<1x128xf32>
    %335 = arith.mulf %334, %334 : vector<1x128xf32>
    %336 = arith.addf %329, %335 : vector<1x128xf32>
    %c24 = arith.constant 24 : index
    %c0_155 = arith.constant 0 : index
    %c0_156 = arith.constant 0 : index
    %337 = vector.load %arg1[%c24, %c0_155, %c0_156] : memref<30x1x128xf32, #tpu.memory_space<vmem>>, vector<1x1x128xf32>
    %338 = vector.shape_cast %337 : vector<1x1x128xf32> to vector<1x128xf32>
    %c24_157 = arith.constant 24 : index
    %c0_158 = arith.constant 0 : index
    %c0_159 = arith.constant 0 : index
    %339 = vector.load %arg2[%c24_157, %c0_158, %c0_159] : memref<30x1x128xf32, #tpu.memory_space<vmem>>, vector<1x1x128xf32>
    %340 = vector.shape_cast %339 : vector<1x1x128xf32> to vector<1x128xf32>
    %341 = arith.subf %338, %340 : vector<1x128xf32>
    %342 = arith.mulf %341, %341 : vector<1x128xf32>
    %343 = arith.addf %336, %342 : vector<1x128xf32>
    %c25 = arith.constant 25 : index
    %c0_160 = arith.constant 0 : index
    %c0_161 = arith.constant 0 : index
    %344 = vector.load %arg1[%c25, %c0_160, %c0_161] : memref<30x1x128xf32, #tpu.memory_space<vmem>>, vector<1x1x128xf32>
    %345 = vector.shape_cast %344 : vector<1x1x128xf32> to vector<1x128xf32>
    %c25_162 = arith.constant 25 : index
    %c0_163 = arith.constant 0 : index
    %c0_164 = arith.constant 0 : index
    %346 = vector.load %arg2[%c25_162, %c0_163, %c0_164] : memref<30x1x128xf32, #tpu.memory_space<vmem>>, vector<1x1x128xf32>
    %347 = vector.shape_cast %346 : vector<1x1x128xf32> to vector<1x128xf32>
    %348 = arith.subf %345, %347 : vector<1x128xf32>
    %349 = arith.mulf %348, %348 : vector<1x128xf32>
    %350 = arith.addf %343, %349 : vector<1x128xf32>
    %c26 = arith.constant 26 : index
    %c0_165 = arith.constant 0 : index
    %c0_166 = arith.constant 0 : index
    %351 = vector.load %arg1[%c26, %c0_165, %c0_166] : memref<30x1x128xf32, #tpu.memory_space<vmem>>, vector<1x1x128xf32>
    %352 = vector.shape_cast %351 : vector<1x1x128xf32> to vector<1x128xf32>
    %c26_167 = arith.constant 26 : index
    %c0_168 = arith.constant 0 : index
    %c0_169 = arith.constant 0 : index
    %353 = vector.load %arg2[%c26_167, %c0_168, %c0_169] : memref<30x1x128xf32, #tpu.memory_space<vmem>>, vector<1x1x128xf32>
    %354 = vector.shape_cast %353 : vector<1x1x128xf32> to vector<1x128xf32>
    %355 = arith.subf %352, %354 : vector<1x128xf32>
    %356 = arith.mulf %355, %355 : vector<1x128xf32>
    %357 = arith.addf %350, %356 : vector<1x128xf32>
    %c27 = arith.constant 27 : index
    %c0_170 = arith.constant 0 : index
    %c0_171 = arith.constant 0 : index
    %358 = vector.load %arg1[%c27, %c0_170, %c0_171] : memref<30x1x128xf32, #tpu.memory_space<vmem>>, vector<1x1x128xf32>
    %359 = vector.shape_cast %358 : vector<1x1x128xf32> to vector<1x128xf32>
    %c27_172 = arith.constant 27 : index
    %c0_173 = arith.constant 0 : index
    %c0_174 = arith.constant 0 : index
    %360 = vector.load %arg2[%c27_172, %c0_173, %c0_174] : memref<30x1x128xf32, #tpu.memory_space<vmem>>, vector<1x1x128xf32>
    %361 = vector.shape_cast %360 : vector<1x1x128xf32> to vector<1x128xf32>
    %362 = arith.subf %359, %361 : vector<1x128xf32>
    %363 = arith.mulf %362, %362 : vector<1x128xf32>
    %364 = arith.addf %357, %363 : vector<1x128xf32>
    %c28 = arith.constant 28 : index
    %c0_175 = arith.constant 0 : index
    %c0_176 = arith.constant 0 : index
    %365 = vector.load %arg1[%c28, %c0_175, %c0_176] : memref<30x1x128xf32, #tpu.memory_space<vmem>>, vector<1x1x128xf32>
    %366 = vector.shape_cast %365 : vector<1x1x128xf32> to vector<1x128xf32>
    %c28_177 = arith.constant 28 : index
    %c0_178 = arith.constant 0 : index
    %c0_179 = arith.constant 0 : index
    %367 = vector.load %arg2[%c28_177, %c0_178, %c0_179] : memref<30x1x128xf32, #tpu.memory_space<vmem>>, vector<1x1x128xf32>
    %368 = vector.shape_cast %367 : vector<1x1x128xf32> to vector<1x128xf32>
    %369 = arith.subf %366, %368 : vector<1x128xf32>
    %370 = arith.mulf %369, %369 : vector<1x128xf32>
    %371 = arith.addf %364, %370 : vector<1x128xf32>
    %c29 = arith.constant 29 : index
    %c0_180 = arith.constant 0 : index
    %c0_181 = arith.constant 0 : index
    %372 = vector.load %arg1[%c29, %c0_180, %c0_181] : memref<30x1x128xf32, #tpu.memory_space<vmem>>, vector<1x1x128xf32>
    %373 = vector.shape_cast %372 : vector<1x1x128xf32> to vector<1x128xf32>
    %c29_182 = arith.constant 29 : index
    %c0_183 = arith.constant 0 : index
    %c0_184 = arith.constant 0 : index
    %374 = vector.load %arg2[%c29_182, %c0_183, %c0_184] : memref<30x1x128xf32, #tpu.memory_space<vmem>>, vector<1x1x128xf32>
    %375 = vector.shape_cast %374 : vector<1x1x128xf32> to vector<1x128xf32>
    %376 = arith.subf %373, %375 : vector<1x128xf32>
    %377 = arith.mulf %376, %376 : vector<1x128xf32>
    %378 = arith.addf %371, %377 : vector<1x128xf32>
    %cst_185 = arith.constant 0.000000e+00 : f32
    %379 = vector.broadcast %cst_185 : f32 to vector<1x128xf32>
    %380 = arith.select %115, %221, %379 : vector<1x128xi1>, vector<1x128xf32>
    %381 = vector.shape_cast %380 : vector<1x128xf32> to vector<1x1x128xf32>
    %cst_186 = arith.constant dense<0.000000e+00> : vector<1xf32>
    %382 = vector.multi_reduction <add>, %381, %cst_186 [1, 2] : vector<1x1x128xf32> to vector<1xf32>
    %383 = vector.shape_cast %382 : vector<1xf32> to vector<1x1x1xf32>
    %384 = vector.extract %383[0, 0, 0] : f32 from vector<1x1x1xf32>
    %cst_187 = arith.constant 5.000000e+00 : f32
    %385 = arith.mulf %cst_187, %384 : f32
    %cst_188 = arith.constant 0.000000e+00 : f32
    %386 = vector.broadcast %cst_188 : f32 to vector<1x128xf32>
    %387 = arith.select %115, %231, %386 : vector<1x128xi1>, vector<1x128xf32>
    %388 = vector.shape_cast %387 : vector<1x128xf32> to vector<1x1x128xf32>
    %cst_189 = arith.constant dense<0.000000e+00> : vector<1xf32>
    %389 = vector.multi_reduction <add>, %388, %cst_189 [1, 2] : vector<1x1x128xf32> to vector<1xf32>
    %390 = vector.shape_cast %389 : vector<1xf32> to vector<1x1x1xf32>
    %391 = vector.extract %390[0, 0, 0] : f32 from vector<1x1x1xf32>
    %cst_190 = arith.constant 5.000000e+00 : f32
    %392 = arith.mulf %cst_190, %391 : f32
    %cst_191 = arith.constant 0.000000e+00 : f32
    %393 = vector.broadcast %cst_191 : f32 to vector<1x128xf32>
    %394 = arith.select %115, %234, %393 : vector<1x128xi1>, vector<1x128xf32>
    %395 = vector.shape_cast %394 : vector<1x128xf32> to vector<1x1x128xf32>
    %cst_192 = arith.constant dense<0.000000e+00> : vector<1xf32>
    %396 = vector.multi_reduction <add>, %395, %cst_192 [1, 2] : vector<1x1x128xf32> to vector<1xf32>
    %397 = vector.shape_cast %396 : vector<1xf32> to vector<1x1x1xf32>
    %398 = vector.extract %397[0, 0, 0] : f32 from vector<1x1x1xf32>
    %cst_193 = arith.constant 0.000000e+00 : f32
    %399 = vector.broadcast %cst_193 : f32 to vector<1x128xf32>
    %400 = arith.select %117, %238, %399 : vector<1x128xi1>, vector<1x128xf32>
    %401 = vector.shape_cast %400 : vector<1x128xf32> to vector<1x1x128xf32>
    %cst_194 = arith.constant dense<0.000000e+00> : vector<1xf32>
    %402 = vector.multi_reduction <add>, %401, %cst_194 [1, 2] : vector<1x1x128xf32> to vector<1xf32>
    %403 = vector.shape_cast %402 : vector<1xf32> to vector<1x1x1xf32>
    %404 = vector.extract %403[0, 0, 0] : f32 from vector<1x1x1xf32>
    %cst_195 = arith.constant 5.000000e-01 : f32
    %405 = arith.mulf %cst_195, %404 : f32
    %cst_196 = arith.constant 0.000000e+00 : f32
    %406 = vector.broadcast %cst_196 : f32 to vector<1x128xf32>
    %407 = arith.select %115, %378, %406 : vector<1x128xi1>, vector<1x128xf32>
    %408 = vector.shape_cast %407 : vector<1x128xf32> to vector<1x1x128xf32>
    %cst_197 = arith.constant dense<0.000000e+00> : vector<1xf32>
    %409 = vector.multi_reduction <add>, %408, %cst_197 [1, 2] : vector<1x1x128xf32> to vector<1xf32>
    %410 = vector.shape_cast %409 : vector<1xf32> to vector<1x1x1xf32>
    %411 = vector.extract %410[0, 0, 0] : f32 from vector<1x1x1xf32>
    %412 = tpu.iota {dimensions = array<i32: 1>} : vector<8x128xi32>
    %413 = tpu.iota {dimensions = array<i32: 0>} : vector<8x128xi32>
    %c0_i32 = arith.constant 0 : i32
    %414 = vector.broadcast %c0_i32 : i32 to vector<8x128xi32>
    %415 = arith.cmpi eq, %413, %414 : vector<8x128xi32>
    %c0_i32_198 = arith.constant 0 : i32
    %416 = vector.broadcast %c0_i32_198 : i32 to vector<8x128xi32>
    %417 = arith.cmpi eq, %412, %416 : vector<8x128xi32>
    %418 = arith.andi %415, %417 : vector<8x128xi1>
    %cst_199 = arith.constant 0.000000e+00 : f32
    %419 = vector.broadcast %385 : f32 to vector<8x128xf32>
    %420 = vector.broadcast %cst_199 : f32 to vector<8x128xf32>
    %421 = arith.select %418, %419, %420 : vector<8x128xi1>, vector<8x128xf32>
    %c1_i32 = arith.constant 1 : i32
    %422 = vector.broadcast %c1_i32 : i32 to vector<8x128xi32>
    %423 = arith.cmpi eq, %412, %422 : vector<8x128xi32>
    %424 = arith.andi %415, %423 : vector<8x128xi1>
    %425 = vector.broadcast %392 : f32 to vector<8x128xf32>
    %426 = arith.select %424, %425, %421 : vector<8x128xi1>, vector<8x128xf32>
    %c2_i32 = arith.constant 2 : i32
    %427 = vector.broadcast %c2_i32 : i32 to vector<8x128xi32>
    %428 = arith.cmpi eq, %412, %427 : vector<8x128xi32>
    %429 = arith.andi %415, %428 : vector<8x128xi1>
    %430 = vector.broadcast %398 : f32 to vector<8x128xf32>
    %431 = arith.select %429, %430, %426 : vector<8x128xi1>, vector<8x128xf32>
    %c3_i32 = arith.constant 3 : i32
    %432 = vector.broadcast %c3_i32 : i32 to vector<8x128xi32>
    %433 = arith.cmpi eq, %412, %432 : vector<8x128xi32>
    %434 = arith.andi %415, %433 : vector<8x128xi1>
    %435 = vector.broadcast %405 : f32 to vector<8x128xf32>
    %436 = arith.select %434, %435, %431 : vector<8x128xi1>, vector<8x128xf32>
    %c4_i32 = arith.constant 4 : i32
    %437 = vector.broadcast %c4_i32 : i32 to vector<8x128xi32>
    %438 = arith.cmpi eq, %412, %437 : vector<8x128xi32>
    %439 = arith.andi %415, %438 : vector<8x128xi1>
    %440 = vector.broadcast %411 : f32 to vector<8x128xf32>
    %441 = arith.select %439, %440, %436 : vector<8x128xi1>, vector<8x128xf32>
    %442 = vector.shape_cast %441 : vector<8x128xf32> to vector<1x8x128xf32>
    %c0_200 = arith.constant 0 : index
    %c0_201 = arith.constant 0 : index
    %c0_202 = arith.constant 0 : index
    %443 = vector.load %arg3[%c0_200, %c0_201, %c0_202] : memref<1x8x128xf32, #tpu.memory_space<vmem>>, vector<1x8x128xf32>
    tpu.vector_store %arg3[%c0_200, %c0_201, %c0_202], %442 {strides = array<i32>} : memref<1x8x128xf32, #tpu.memory_space<vmem>>, vector<1x8x128xf32>,
    return
  }
  func.func @transform_0(%arg0: i32) -> (i32, i32, i32) {
    %c0_i32 = arith.constant 0 : i32
    %c0_i32_0 = arith.constant 0 : i32
    %c0_i32_1 = arith.constant 0 : i32
    return %c0_i32, %arg0, %c0_i32_0 : i32, i32, i32
  }
  func.func @transform_1(%arg0: i32) -> (i32, i32, i32) {
    %c0_i32 = arith.constant 0 : i32
    %c0_i32_0 = arith.constant 0 : i32
    %c0_i32_1 = arith.constant 0 : i32
    return %c0_i32, %arg0, %c0_i32_0 : i32, i32, i32
  }
  func.func @transform_2(%arg0: i32) -> (i32, i32, i32) {
    %c0_i32 = arith.constant 0 : i32
    %c0_i32_0 = arith.constant 0 : i32
    %c0_i32_1 = arith.constant 0 : i32
    return %arg0, %c0_i32, %c0_i32_0 : i32, i32, i32
  }
}

</mosaic_0001>

<llo_original>
// kernel: tpu_custom_call.1
$region0: #{tpu_custom_call.1}
  #allocation0 [shape = 'u32[]', space=smem, size = 0x4, offset = 0x4, fixed_abs, tag = 'smem constant byte address 0x4 - core index']
  #allocation1 [shape = 'u32[144,128]{1,0:T(1,128)}', space=vmem, size = 0x12000, scoped, tag = 'internal scratch']
  %s0 = inlined_call_operand.hbm [shape: f32[30,1,128], index: 0, kind: input, shape index: {}]
  %s1 = inlined_call_operand.hbm [shape: f32[30,1,128], index: 1, kind: input, shape index: {}]
  %s2 = inlined_call_operand.hbm [shape: f32[1,8,128], index: 2, kind: output, shape index: {}]
  %s3 = sld [smem:[#allocation0]]
  $region26: #{tpu_custom_call.1} parent=0
    _
  %s5 = ssub.s32 1, %s3
  %s6 = scalar_select 0, %s5, %s3
  $region1: #{tpu_custom_call.1} parent=0
    #allocation2 [shape = 'u8[15360]{0}', space=vmem, size = 0x3c00, scoped, tag = 'input window, operand 0, single buffered']
    #allocation3 [shape = 's32[1]{0}', space=sflag, size = 0x4, scoped, tag = 'scoped memory for tpu_custom_call.1']
    #allocation4 [shape = 's32[1]{0}', space=sflag, size = 0x4, scoped, tag = 'scoped memory for tpu_custom_call.1']
    #allocation5 [shape = 'u8[15360]{0}', space=vmem, size = 0x3c00, scoped, tag = 'input window, operand 1, single buffered']
    #allocation6 [shape = 's32[1]{0}', space=sflag, size = 0x4, scoped, tag = 'scoped memory for tpu_custom_call.1']
    #allocation7 [shape = 'u8[4096]{0}', space=vmem, size = 0x1000, scoped, tag = 'output window, operand 0, single buffered']
    %7 = vsyncpa [#allocation3], 0
    %8 = vsyncpa [#allocation6], 0
    %9 = vsyncpa [#allocation4], 0
    // Predicated region
    $region2: #{tpu_custom_call.1} parent=1 // pred_check
      _
    $region3: #{tpu_custom_call.1} parent=1 // pred_check_branch
      %11 = sbr.rel (0) target = $region5
    $region4: #{tpu_custom_call.1} parent=1 // pred_region
      %s13 = ssub.s32 480, 480
      %14 = vsyncadd [#allocation3], %s13
      %s15 = sshll.u32 [#allocation2], 4
      %s16 = int_to_ptr.vmem [resolvable:$true] %s15
      %21 = dma.hbm_to_vmem [thread:$0]  %s0, 480, %s16, [#allocation3], 16, 16, 1
    $region5: #{tpu_custom_call.1} parent=1 // pred_fallthru
      _
    // Predicated region
    $region6: #{tpu_custom_call.1} parent=1 // pred_check
      _
    $region7: #{tpu_custom_call.1} parent=1 // pred_check_branch
      %23 = sbr.rel (0) target = $region9
    $region8: #{tpu_custom_call.1} parent=1 // pred_region
      %s25 = ssub.s32 480, 480
      %26 = vsyncadd [#allocation6], %s25
      %s27 = sshll.u32 [#allocation5], 4
      %s28 = int_to_ptr.vmem [resolvable:$true] %s27
      %33 = dma.hbm_to_vmem [thread:$0]  %s1, 480, %s28, [#allocation6], 16, 16, 1
    $region9: #{tpu_custom_call.1} parent=1 // pred_fallthru
      _
    // Predicated region
    $region10: #{tpu_custom_call.1} parent=1 // pred_check
      _
    $region11: #{tpu_custom_call.1} parent=1 // pred_check_branch
      %35 = sbr.rel (0) target = $region13
    $region12: #{tpu_custom_call.1} parent=1 // pred_region
      %36 = dma.done [#allocation3], 480
    $region13: #{tpu_custom_call.1} parent=1 // pred_fallthru
      _
    // Predicated region
    $region14: #{tpu_custom_call.1} parent=1 // pred_check
      _
    $region15: #{tpu_custom_call.1} parent=1 // pred_check_branch
      %38 = sbr.rel (0) target = $region17
    $region16: #{tpu_custom_call.1} parent=1 // pred_region
      %39 = dma.done [#allocation6], 480
    $region17: #{tpu_custom_call.1} parent=1 // pred_fallthru
      _
    %v40 = vld [vmem:[#allocation2] sm:$0x1]
    %s41 = scalar_lea.vmem [#allocation2], 1
    %v42 = vld [vmem:[%s41] sm:$0x1]
    %s43 = scalar_lea.vmem [#allocation2], 2
    %v44 = vld [vmem:[%s43] sm:$0x1]
    %s45 = scalar_lea.vmem [#allocation2], 3
    %v46 = vld [vmem:[%s45] sm:$0x1]
    %s47 = scalar_lea.vmem [#allocation2], 4
    %v48 = vld [vmem:[%s47] sm:$0x1]
    %v49 = vmul.f32 %v40, 0.14285715
    %v50 = vmul.f32 %v42, 0.14285715
    %v51 = vmul.f32 %v44, 0.5
    %v52 = vsub.f32 %v49, %v51
    %v53 = vmul.f32 %v46, 0.5
    %v54 = vsub.f32 %v50, %v53
    %v55 = vadd.f32 %v49, %v51
    %v56 = vadd.f32 %v50, %v53
    %v57 = vsub.f32 %v55, %v52
    %v58 = vsub.f32 %v56, %v54
    %v59 = vmul.f32 %v57, %v58
    %s60 = scalar_lea.vmem [#allocation2], 5
    %v61 = vld [vmem:[%s60] sm:$0x1]
    %s62 = scalar_lea.vmem [#allocation2], 6
    %v63 = vld [vmem:[%s62] sm:$0x1]
    %s64 = scalar_lea.vmem [#allocation2], 7
    %v65 = vld [vmem:[%s64] sm:$0x1]
    %s66 = scalar_lea.vmem [#allocation2], 8
    %v67 = vld [vmem:[%s66] sm:$0x1]
    %s68 = scalar_lea.vmem [#allocation2], 9
    %v69 = vld [vmem:[%s68] sm:$0x1]
    %v70 = vmul.f32 %v61, 0.14285715
    %v71 = vmul.f32 %v63, 0.14285715
    %v72 = vmul.f32 %v65, 0.5
    %v73 = vsub.f32 %v70, %v72
    %v74 = vmul.f32 %v67, 0.5
    %v75 = vsub.f32 %v71, %v74
    %v76 = vadd.f32 %v70, %v72
    %v77 = vadd.f32 %v71, %v74
    %v78 = vsub.f32 %v76, %v73
    %v79 = vsub.f32 %v77, %v75
    %v80 = vmul.f32 %v78, %v79
    %v81 = vld [vmem:[#allocation5] sm:$0x1]
    %s82 = scalar_lea.vmem [#allocation5], 1
    %v83 = vld [vmem:[%s82] sm:$0x1]
    %s84 = scalar_lea.vmem [#allocation5], 2
    %v85 = vld [vmem:[%s84] sm:$0x1]
    %s86 = scalar_lea.vmem [#allocation5], 3
    %v87 = vld [vmem:[%s86] sm:$0x1]
    %s88 = scalar_lea.vmem [#allocation5], 4
    %v89 = vld [vmem:[%s88] sm:$0x1]
    %v90 = vmul.f32 %v81, 0.14285715
    %v91 = vmul.f32 %v83, 0.14285715
    %v92 = vmul.f32 %v85, 0.5
    %v93 = vsub.f32 %v90, %v92
    %v94 = vmul.f32 %v87, 0.5
    %v95 = vsub.f32 %v91, %v94
    %v96 = vadd.f32 %v90, %v92
    %v97 = vadd.f32 %v91, %v94
    %v98 = vsub.f32 %v96, %v93
    %v99 = vsub.f32 %v97, %v95
    %v100 = vmul.f32 %v98, %v99
    %s101 = scalar_lea.vmem [#allocation5], 5
    %v102 = vld [vmem:[%s101] sm:$0x1]
    %s103 = scalar_lea.vmem [#allocation5], 6
    %v104 = vld [vmem:[%s103] sm:$0x1]
    %s105 = scalar_lea.vmem [#allocation5], 7
    %v106 = vld [vmem:[%s105] sm:$0x1]
    %s107 = scalar_lea.vmem [#allocation5], 8
    %v108 = vld [vmem:[%s107] sm:$0x1]
    %v109 = vmul.f32 %v102, 0.14285715
    %v110 = vmul.f32 %v104, 0.14285715
    %v111 = vmul.f32 %v106, 0.5
    %v112 = vsub.f32 %v109, %v111
    %v113 = vmul.f32 %v108, 0.5
    %v114 = vsub.f32 %v110, %v113
    %v115 = vadd.f32 %v109, %v111
    %v116 = vadd.f32 %v110, %v113
    %v117 = vsub.f32 %v115, %v112
    %v118 = vsub.f32 %v116, %v114
    %v119 = vmul.f32 %v117, %v118
    %vm120 = vcmp.eq.f32.partialorder %v89, 1.0
    %vm121 = vcmp.eq.f32.partialorder %v89, 0.0
    %v122 = vmax.f32 %v93, %v52
    %v123 = vmax.f32 %v95, %v54
    %v124 = vmin.f32 %v96, %v55
    %v125 = vmin.f32 %v97, %v56
    %v126 = vsub.f32 %v124, %v122
    %v127 = vmax.f32 %v126, 0.0
    %v128 = vsub.f32 %v125, %v123
    %v129 = vmax.f32 %v128, 0.0
    %v130 = vmul.f32 %v127, %v129
    %v131 = vadd.f32 %v100, %v59
    %v132 = vsub.f32 %v131, %v130
    %v133 = vadd.f32 %v132, 1e-06
    %v134 = vrcp.pop %v133
    %v135 = vmul.f32 %v130, %v134
    %v136 = vmax.f32 %v93, %v73
    %v137 = vmax.f32 %v95, %v75
    %v138 = vmin.f32 %v96, %v76
    %v139 = vmin.f32 %v97, %v77
    %v140 = vsub.f32 %v138, %v136
    %v141 = vmax.f32 %v140, 0.0
    %v142 = vsub.f32 %v139, %v137
    %v143 = vmax.f32 %v142, 0.0
    %v144 = vmul.f32 %v141, %v143
    %v145 = vadd.f32 %v100, %v80
    %v146 = vsub.f32 %v145, %v144
    %v147 = vadd.f32 %v146, 1e-06
    %v148 = vrcp.pop %v147
    %v149 = vmul.f32 %v144, %v148
    %vm150 = vcmp.gt.f32.partialorder %v149, %v135
    %v151 = vsel %vm150, %v61, %v40
    %v152 = vsel %vm150, %v63, %v42
    %v153 = vsel %vm150, %v65, %v44
    %v154 = vsel %vm150, %v67, %v46
    %v155 = vsel %vm150, %v69, %v48
    %v156 = vsel %vm150, %v149, %v135
    %v157 = vsub.f32 %v151, %v81
    %v158 = vmul.f32 %v157, %v157
    %v159 = vadd.f32 %v158, 0.0
    %v160 = vsub.f32 %v152, %v83
    %v161 = vmul.f32 %v160, %v160
    %v162 = vadd.f32 %v159, %v161
    %v163 = vrsqrt.pop %v153
    %v164 = vmul.f32 %v153, %v163
    %vm165 = vcmp.eq.f32.partialorder %v153, inf
    %v166 = vsel %vm165, %v153, %v164
    %vm167 = vcmp.eq.f32.partialorder %v153, 0.0
    %v168 = vand.u32 %v153, 2147483648
    %v169 = vsel %vm167, %v168, %v166
    %v170 = vrsqrt.pop %v85
    %v171 = vmul.f32 %v85, %v170
    %vm172 = vcmp.eq.f32.partialorder %v85, inf
    %v173 = vsel %vm172, %v85, %v171
    %vm174 = vcmp.eq.f32.partialorder %v85, 0.0
    %v175 = vand.u32 %v85, 2147483648
    %v176 = vsel %vm174, %v175, %v173
    %v177 = vsub.f32 %v169, %v176
    %v178 = vmul.f32 %v177, %v177
    %v179 = vrsqrt.pop %v154
    %v180 = vmul.f32 %v154, %v179
    %vm181 = vcmp.eq.f32.partialorder %v154, inf
    %v182 = vsel %vm181, %v154, %v180
    %vm183 = vcmp.eq.f32.partialorder %v154, 0.0
    %v184 = vand.u32 %v154, 2147483648
    %v185 = vsel %vm183, %v184, %v182
    %v186 = vrsqrt.pop %v87
    %v187 = vmul.f32 %v87, %v186
    %vm188 = vcmp.eq.f32.partialorder %v87, inf
    %v189 = vsel %vm188, %v87, %v187
    %vm190 = vcmp.eq.f32.partialorder %v87, 0.0
    %v191 = vand.u32 %v87, 2147483648
    %v192 = vsel %vm190, %v191, %v189
    %v193 = vsub.f32 %v185, %v192
    %v194 = vmul.f32 %v193, %v193
    %v195 = vadd.f32 %v178, %v194
    %v196 = vadd.f32 %v195, 0.0
    %v197 = vsub.f32 %v155, %v156
    %v198 = vmul.f32 %v197, %v197
    %v199 = vadd.f32 %v198, 0.0
    %v200 = vmax.f32 %v112, %v52
    %v201 = vmax.f32 %v114, %v54
    %v202 = vmin.f32 %v115, %v55
    %v203 = vmin.f32 %v116, %v56
    %v204 = vsub.f32 %v202, %v200
    %v205 = vmax.f32 %v204, 0.0
    %v206 = vsub.f32 %v203, %v201
    %v207 = vmax.f32 %v206, 0.0
    %v208 = vmul.f32 %v205, %v207
    %v209 = vadd.f32 %v119, %v59
    %v210 = vsub.f32 %v209, %v208
    %v211 = vadd.f32 %v210, 1e-06
    %v212 = vrcp.pop %v211
    %v213 = vmul.f32 %v208, %v212
    %v214 = vmax.f32 %v112, %v73
    %v215 = vmax.f32 %v114, %v75
    %v216 = vmin.f32 %v115, %v76
    %v217 = vmin.f32 %v116, %v77
    %v218 = vsub.f32 %v216, %v214
    %v219 = vmax.f32 %v218, 0.0
    %v220 = vsub.f32 %v217, %v215
    %v221 = vmax.f32 %v220, 0.0
    %v222 = vmul.f32 %v219, %v221
    %v223 = vadd.f32 %v119, %v80
    %v224 = vsub.f32 %v223, %v222
    %v225 = vadd.f32 %v224, 1e-06
    %v226 = vrcp.pop %v225
    %v227 = vmul.f32 %v222, %v226
    %vm228 = vcmp.gt.f32.partialorder %v227, %v213
    %v229 = vsel %vm228, %v61, %v40
    %v230 = vsel %vm228, %v63, %v42
    %v231 = vsel %vm228, %v65, %v44
    %v232 = vsel %vm228, %v67, %v46
    %v233 = vsel %vm228, %v69, %v48
    %v234 = vsel %vm228, %v227, %v213
    %v235 = vsub.f32 %v229, %v102
    %v236 = vmul.f32 %v235, %v235
    %v237 = vadd.f32 %v162, %v236
    %v238 = vsub.f32 %v230, %v104
    %v239 = vmul.f32 %v238, %v238
    %v240 = vadd.f32 %v237, %v239
    %v241 = vrsqrt.pop %v231
    %v242 = vmul.f32 %v231, %v241
    %vm243 = vcmp.eq.f32.partialorder %v231, inf
    %v244 = vsel %vm243, %v231, %v242
    %vm245 = vcmp.eq.f32.partialorder %v231, 0.0
    %v246 = vand.u32 %v231, 2147483648
    %v247 = vsel %vm245, %v246, %v244
    %v248 = vrsqrt.pop %v106
    %v249 = vmul.f32 %v106, %v248
    %vm250 = vcmp.eq.f32.partialorder %v106, inf
    %v251 = vsel %vm250, %v106, %v249
    %vm252 = vcmp.eq.f32.partialorder %v106, 0.0
    %v253 = vand.u32 %v106, 2147483648
    %v254 = vsel %vm252, %v253, %v251
    %v255 = vsub.f32 %v247, %v254
    %v256 = vmul.f32 %v255, %v255
    %v257 = vrsqrt.pop %v232
    %v258 = vmul.f32 %v232, %v257
    %vm259 = vcmp.eq.f32.partialorder %v232, inf
    %v260 = vsel %vm259, %v232, %v258
    %vm261 = vcmp.eq.f32.partialorder %v232, 0.0
    %v262 = vand.u32 %v232, 2147483648
    %v263 = vsel %vm261, %v262, %v260
    %v264 = vrsqrt.pop %v108
    %v265 = vmul.f32 %v108, %v264
    %vm266 = vcmp.eq.f32.partialorder %v108, inf
    %v267 = vsel %vm266, %v108, %v265
    %vm268 = vcmp.eq.f32.partialorder %v108, 0.0
    %v269 = vand.u32 %v108, 2147483648
    %v270 = vsel %vm268, %v269, %v267
    %v271 = vsub.f32 %v263, %v270
    %v272 = vmul.f32 %v271, %v271
    %v273 = vadd.f32 %v256, %v272
    %v274 = vadd.f32 %v196, %v273
    %v275 = vsub.f32 %v233, %v234
    %v276 = vmul.f32 %v275, %v275
    %v277 = vadd.f32 %v199, %v276
    %v278 = vmul.f32 %v48, %v48
    %v279 = vadd.f32 %v278, 0.0
    %v280 = vmul.f32 %v69, %v69
    %v281 = vadd.f32 %v279, %v280
    %s282 = scalar_lea.vmem [#allocation2], 10
    %v283 = vld [vmem:[%s282] sm:$0x1]
    %s284 = scalar_lea.vmem [#allocation5], 10
    %v285 = vld [vmem:[%s284] sm:$0x1]
    %v286 = vsub.f32 %v283, %v285
    %v287 = vmul.f32 %v286, %v286
    %v288 = vadd.f32 %v287, 0.0
    %s289 = scalar_lea.vmem [#allocation2], 11
    %v290 = vld [vmem:[%s289] sm:$0x1]
    %s291 = scalar_lea.vmem [#allocation5], 11
    %v292 = vld [vmem:[%s291] sm:$0x1]
    %v293 = vsub.f32 %v290, %v292
    %v294 = vmul.f32 %v293, %v293
    %v295 = vadd.f32 %v288, %v294
    %s296 = scalar_lea.vmem [#allocation2], 12
    %v297 = vld [vmem:[%s296] sm:$0x1]
    %s298 = scalar_lea.vmem [#allocation5], 12
    %v299 = vld [vmem:[%s298] sm:$0x1]
    %v300 = vsub.f32 %v297, %v299
    %v301 = vmul.f32 %v300, %v300
    %v302 = vadd.f32 %v295, %v301
    %s303 = scalar_lea.vmem [#allocation2], 13
    %v304 = vld [vmem:[%s303] sm:$0x1]
    %s305 = scalar_lea.vmem [#allocation5], 13
    %v306 = vld [vmem:[%s305] sm:$0x1]
    %v307 = vsub.f32 %v304, %v306
    %v308 = vmul.f32 %v307, %v307
    %v309 = vadd.f32 %v302, %v308
    %s310 = scalar_lea.vmem [#allocation2], 14
    %v311 = vld [vmem:[%s310] sm:$0x1]
    %s312 = scalar_lea.vmem [#allocation5], 14
    %v313 = vld [vmem:[%s312] sm:$0x1]
    %v314 = vsub.f32 %v311, %v313
    %v315 = vmul.f32 %v314, %v314
    %v316 = vadd.f32 %v309, %v315
    %s317 = scalar_lea.vmem [#allocation2], 15
    %v318 = vld [vmem:[%s317] sm:$0x1]
    %s319 = scalar_lea.vmem [#allocation5], 15
    %v320 = vld [vmem:[%s319] sm:$0x1]
    %v321 = vsub.f32 %v318, %v320
    %v322 = vmul.f32 %v321, %v321
    %v323 = vadd.f32 %v316, %v322
    %s324 = scalar_lea.vmem [#allocation2], 16
    %v325 = vld [vmem:[%s324] sm:$0x1]
    %s326 = scalar_lea.vmem [#allocation5], 16
    %v327 = vld [vmem:[%s326] sm:$0x1]
    %v328 = vsub.f32 %v325, %v327
    %v329 = vmul.f32 %v328, %v328
    %v330 = vadd.f32 %v323, %v329
    %s331 = scalar_lea.vmem [#allocation2], 17
    %v332 = vld [vmem:[%s331] sm:$0x1]
    %s333 = scalar_lea.vmem [#allocation5], 17
    %v334 = vld [vmem:[%s333] sm:$0x1]
    %v335 = vsub.f32 %v332, %v334
    %v336 = vmul.f32 %v335, %v335
    %v337 = vadd.f32 %v330, %v336
    %s338 = scalar_lea.vmem [#allocation2], 18
    %v339 = vld [vmem:[%s338] sm:$0x1]
    %s340 = scalar_lea.vmem [#allocation5], 18
    %v341 = vld [vmem:[%s340] sm:$0x1]
    %v342 = vsub.f32 %v339, %v341
    %v343 = vmul.f32 %v342, %v342
    %v344 = vadd.f32 %v337, %v343
    %s345 = scalar_lea.vmem [#allocation2], 19
    %v346 = vld [vmem:[%s345] sm:$0x1]
    %s347 = scalar_lea.vmem [#allocation5], 19
    %v348 = vld [vmem:[%s347] sm:$0x1]
    %v349 = vsub.f32 %v346, %v348
    %v350 = vmul.f32 %v349, %v349
    %v351 = vadd.f32 %v344, %v350
    %s352 = scalar_lea.vmem [#allocation2], 20
    %v353 = vld [vmem:[%s352] sm:$0x1]
    %s354 = scalar_lea.vmem [#allocation5], 20
    %v355 = vld [vmem:[%s354] sm:$0x1]
    %v356 = vsub.f32 %v353, %v355
    %v357 = vmul.f32 %v356, %v356
    %v358 = vadd.f32 %v351, %v357
    %s359 = scalar_lea.vmem [#allocation2], 21
    %v360 = vld [vmem:[%s359] sm:$0x1]
    %s361 = scalar_lea.vmem [#allocation5], 21
    %v362 = vld [vmem:[%s361] sm:$0x1]
    %v363 = vsub.f32 %v360, %v362
    %v364 = vmul.f32 %v363, %v363
    %v365 = vadd.f32 %v358, %v364
    %s366 = scalar_lea.vmem [#allocation2], 22
    %v367 = vld [vmem:[%s366] sm:$0x1]
    %s368 = scalar_lea.vmem [#allocation5], 22
    %v369 = vld [vmem:[%s368] sm:$0x1]
    %v370 = vsub.f32 %v367, %v369
    %v371 = vmul.f32 %v370, %v370
    %v372 = vadd.f32 %v365, %v371
    %s373 = scalar_lea.vmem [#allocation2], 23
    %v374 = vld [vmem:[%s373] sm:$0x1]
    %s375 = scalar_lea.vmem [#allocation5], 23
    %v376 = vld [vmem:[%s375] sm:$0x1]
    %v377 = vsub.f32 %v374, %v376
    %v378 = vmul.f32 %v377, %v377
    %v379 = vadd.f32 %v372, %v378
    %s380 = scalar_lea.vmem [#allocation2], 24
    %v381 = vld [vmem:[%s380] sm:$0x1]
    %s382 = scalar_lea.vmem [#allocation5], 24
    %v383 = vld [vmem:[%s382] sm:$0x1]
    %v384 = vsub.f32 %v381, %v383
    %v385 = vmul.f32 %v384, %v384
    %v386 = vadd.f32 %v379, %v385
    %s387 = scalar_lea.vmem [#allocation2], 25
    %v388 = vld [vmem:[%s387] sm:$0x1]
    %s389 = scalar_lea.vmem [#allocation5], 25
    %v390 = vld [vmem:[%s389] sm:$0x1]
    %v391 = vsub.f32 %v388, %v390
    %v392 = vmul.f32 %v391, %v391
    %v393 = vadd.f32 %v386, %v392
    %s394 = scalar_lea.vmem [#allocation2], 26
    %v395 = vld [vmem:[%s394] sm:$0x1]
    %s396 = scalar_lea.vmem [#allocation5], 26
    %v397 = vld [vmem:[%s396] sm:$0x1]
    %v398 = vsub.f32 %v395, %v397
    %v399 = vmul.f32 %v398, %v398
    %v400 = vadd.f32 %v393, %v399
    %s401 = scalar_lea.vmem [#allocation2], 27
    %v402 = vld [vmem:[%s401] sm:$0x1]
    %s403 = scalar_lea.vmem [#allocation5], 27
    %v404 = vld [vmem:[%s403] sm:$0x1]
    %v405 = vsub.f32 %v402, %v404
    %v406 = vmul.f32 %v405, %v405
    %v407 = vadd.f32 %v400, %v406
    %s408 = scalar_lea.vmem [#allocation2], 28
    %v409 = vld [vmem:[%s408] sm:$0x1]
    %s410 = scalar_lea.vmem [#allocation5], 28
    %v411 = vld [vmem:[%s410] sm:$0x1]
    %v412 = vsub.f32 %v409, %v411
    %v413 = vmul.f32 %v412, %v412
    %v414 = vadd.f32 %v407, %v413
    %s415 = scalar_lea.vmem [#allocation2], 29
    %v416 = vld [vmem:[%s415] sm:$0x1]
    %s417 = scalar_lea.vmem [#allocation5], 29
    %v418 = vld [vmem:[%s417] sm:$0x1]
    %v419 = vsub.f32 %v416, %v418
    %v420 = vmul.f32 %v419, %v419
    %v421 = vadd.f32 %v414, %v420
    %v422 = vsel %vm120, %v240, 0.0
    %vm423 = vcmask 1040384
    %v424 = vsel %vm423, %v422, 0.0
    %425 = vadd.xlane.f32.xlu0 %v424
    %v426 = vpop.xlane.xlu0 %425
    %v427 = vrot.slane %v426, 4
    %v428 = vadd.f32 %v426, %v427
    %v429 = vrot.slane %v428, 2
    %v430 = vadd.f32 %v428, %v429
    %v431 = vrot.slane %v430, 1
    %v432 = vadd.f32 %v430, %v431
    %s433 = vtos %v432
    %s434 = smul.f32 %s433, 5.0
    %v435 = vsel %vm120, %v274, 0.0
    %v436 = vsel %vm423, %v435, 0.0
    %437 = vadd.xlane.f32.xlu0 %v436
    %v438 = vpop.xlane.xlu0 %437
    %v439 = vrot.slane %v438, 4
    %v440 = vadd.f32 %v438, %v439
    %v441 = vrot.slane %v440, 2
    %v442 = vadd.f32 %v440, %v441
    %v443 = vrot.slane %v442, 1
    %v444 = vadd.f32 %v442, %v443
    %s445 = vtos %v444
    %s446 = smul.f32 %s445, 5.0
    %v447 = vsel %vm120, %v277, 0.0
    %v448 = vsel %vm423, %v447, 0.0
    %449 = vadd.xlane.f32.xlu0 %v448
    %v450 = vpop.xlane.xlu0 %449
    %v451 = vrot.slane %v450, 4
    %v452 = vadd.f32 %v450, %v451
    %v453 = vrot.slane %v452, 2
    %v454 = vadd.f32 %v452, %v453
    %v455 = vrot.slane %v454, 1
    %v456 = vadd.f32 %v454, %v455
    %s457 = vtos %v456
    %v458 = vsel %vm121, %v281, 0.0
    %v459 = vsel %vm423, %v458, 0.0
    %460 = vadd.xlane.f32.xlu0 %v459
    %v461 = vpop.xlane.xlu0 %460
    %v462 = vrot.slane %v461, 4
    %v463 = vadd.f32 %v461, %v462
    %v464 = vrot.slane %v463, 2
    %v465 = vadd.f32 %v463, %v464
    %v466 = vrot.slane %v465, 1
    %v467 = vadd.f32 %v465, %v466
    %s468 = vtos %v467
    %s469 = smul.f32 %s468, 0.5
    %v470 = vsel %vm120, %v421, 0.0
    %v471 = vsel %vm423, %v470, 0.0
    %472 = vadd.xlane.f32.xlu0 %v471
    %v473 = vpop.xlane.xlu0 %472
    %v474 = vrot.slane %v473, 4
    %v475 = vadd.f32 %v473, %v474
    %v476 = vrot.slane %v475, 2
    %v477 = vadd.f32 %v475, %v476
    %v478 = vrot.slane %v477, 1
    %v479 = vadd.f32 %v477, %v478
    %s480 = vtos %v479
    %v481 = vlaneseq
    %v482 = vand.u32 %v481, 127
    %v483 = vlaneseq
    %v484 = vshrl.u32 %v483, 7
    %vm485 = vcmp.eq.s32.totalorder %v484, 0
    %vm486 = vcmp.eq.s32.totalorder %v482, 0
    %vm487 = vmand %vm485, %vm486
    %v488 = vstv %s434
    %v489 = vsel %vm487, %v488, 0.0
    %vm490 = vcmp.eq.s32.totalorder %v482, 1
    %vm491 = vmand %vm485, %vm490
    %v492 = vstv %s446
    %v493 = vsel %vm491, %v492, %v489
    %vm494 = vcmp.eq.s32.totalorder %v482, 2
    %vm495 = vmand %vm485, %vm494
    %v496 = vstv %s457
    %v497 = vsel %vm495, %v496, %v493
    %vm498 = vcmp.eq.s32.totalorder %v482, 3
    %vm499 = vmand %vm485, %vm498
    %v500 = vstv %s469
    %v501 = vsel %vm499, %v500, %v497
    %vm502 = vcmp.eq.s32.totalorder %v482, 4
    %vm503 = vmand %vm485, %vm502
    %v504 = vstv %s480
    %v505 = vsel %vm503, %v504, %v501
    %506 = vst [vmem:[#allocation7] sm:$0xff] %v505
    // Predicated region
    $region18: #{tpu_custom_call.1} parent=1 // pred_check
      _
    $region19: #{tpu_custom_call.1} parent=1 // pred_check_branch
      %508 = sbr.rel (0) target = $region21
    $region20: #{tpu_custom_call.1} parent=1 // pred_region
      %s510 = ssub.s32 128, 128
      %511 = vsyncadd [#allocation4], %s510
      %s513 = sshll.u32 [#allocation7], 4
      %s514 = int_to_ptr.vmem [resolvable:$true] %s513
      %516 = dma.vmem_to_hbm [thread:$0]  %s514, 128, %s2, [#allocation4]
    $region21: #{tpu_custom_call.1} parent=1 // pred_fallthru
      _
    // Predicated region
    $region22: #{tpu_custom_call.1} parent=1 // pred_check
      _
    $region23: #{tpu_custom_call.1} parent=1 // pred_check_branch
      %518 = sbr.rel (0) target = $region25
    $region24: #{tpu_custom_call.1} parent=1 // pred_region
      %519 = dma.done [#allocation4], 128
    $region25: #{tpu_custom_call.1} parent=1 // pred_fallthru
      _
    %520 = vsyncpa [#allocation3], 1
    %521 = vsyncpa [#allocation6], 1
    %522 = vsyncpa [#allocation4], 1

</llo_original>
